<compile_context>
chip_gen: v7x
topology: tpu7x:2x2x1
jax: 0.10.0
libtpu: 0.0.40
codegen_flags: <defaults>
</compile_context>

<pallas_src>
import functools
import math

import jax
import jax.numpy as jnp
from jax.experimental import pallas as pl
from jax.experimental.pallas import tpu as pltpu

_SUBLANE = 8
_BLOCK_BYTES_TARGET = 8 << 20   # ~8 MiB per input block -> per-step overhead < ~5%


def _ceil_div(a: int, b: int) -> int:
    return -(-a // b)


def _round_up(n: int, m: int) -> int:
    return _ceil_div(n, m) * m


def _vmem_budgets() -> tuple[int, int]:
    """Generation-aware (vmem_limit_bytes, tile-sizing budget)."""
    try:
        cap = pltpu.get_tpu_info().vmem_capacity_bytes
    except Exception:  # pragma: no cover - e.g. interpret mode / unknown chip
        cap = 64 << 20
    if cap >= (128 << 20):                       # v5e / v6e: 128 MiB physical VMEM
        return 100 << 20, 84 << 20
    # v7x: 64 MiB per TensorCore -> ~42 MiB limit / ~29 MiB sizing budget
    return int(cap * 0.65), int(cap * 0.45)


def _choose_tile_rows(rows: int, hidden: int, itemsize: int, vmem_budget: int) -> int:
    """Row tile (multiple of 8): byte-targeted, VMEM-budgeted, >=4 even grid steps."""
    # Per block row: 2 double-buffered input + 2 output buffers (itemsize each)
    # plus ~3 f32-wide in-kernel intermediates (upcast / abs / quantized).
    per_row = hidden * (4 * itemsize + 3 * 4)
    fit = max(_SUBLANE, (vmem_budget // per_row) // _SUBLANE * _SUBLANE)
    # Byte target for the input block itself (keeps per-step overhead small
    # without the old hard 1024-row cap that starved small-hidden shapes).
    target = max(_SUBLANE,
                 (_BLOCK_BYTES_TARGET // max(1, hidden * itemsize)) // _SUBLANE * _SUBLANE)
    tile = min(fit, target)
    # Aim for >= 4 grid steps (>= 2 blocks per v7x TensorCore) when rows allow.
    if rows >= 4 * _SUBLANE:
        tile = min(tile, max(_SUBLANE, _round_up(_ceil_div(rows, 4), _SUBLANE)))
    tile = min(tile, _round_up(rows, _SUBLANE))
    tile = max(_SUBLANE, tile)
    # Prefer an even number of steps (balanced across v7x's two cores).
    steps = _ceil_div(rows, tile)
    if steps > 1 and steps % 2 == 1:
        alt = _round_up(_ceil_div(rows, steps + 1), _SUBLANE)
        if alt >= _SUBLANE and _ceil_div(rows, alt) % 2 == 0:
            tile = alt
    return tile


def _actquant_kernel(x_ref, o_ref, *, bits: int, inv_hidden: float):
    # Elementwise math in f32 (exact for f32 inputs; narrower inputs are upcast
    # so round / clip matches torch semantics).
    x = x_ref[...].astype(jnp.float32)
    eps = jnp.float32(1e-8)
    if bits == 8:
        # Row statistic: max-abs (per-row, so garbage rows of a partial block
        # only affect garbage output rows, which are dropped on writeback).
        gamma = jnp.max(jnp.abs(x), axis=-1, keepdims=True)           # (rows, 1)
        inv = pl.reciprocal(gamma + eps, approx=False)                # exact: keeps buckets
        quantized = jnp.clip(jnp.round(x * (jnp.float32(127.0) * inv)), -128.0, 127.0)
        out = quantized * (gamma * jnp.float32(1.0 / 127.0))
    elif bits == 4:
        # Row statistic: mean-abs over the TRUE hidden size.
        beta = jnp.sum(jnp.abs(x), axis=-1, keepdims=True) * jnp.float32(inv_hidden)
        s7 = math.sqrt(7.0)
        inv = pl.reciprocal(beta + eps, approx=False)
        quantized = jnp.clip(jnp.round(x * (jnp.float32(s7) * inv)), -8.0, 7.0)
        out = quantized * (beta * jnp.float32(1.0 / s7))
    else:
        raise ValueError(f"Unsupported bit width: {bits}")
    o_ref[...] = out.astype(o_ref.dtype)


def activation_quantize(x: jax.Array, bits: int = 8) -> jax.Array:
    """Fake-quantize activations along the last axis (INT8 or INT4)."""
    if bits not in (8, 4):
        raise ValueError(f"Unsupported bit width: {bits}")
    orig_shape = x.shape
    hidden = orig_shape[-1]
    rows = math.prod(orig_shape[:-1]) if len(orig_shape) > 1 else 1
    x2d = x.reshape(rows, hidden)

    itemsize = jnp.dtype(x.dtype).itemsize
    vmem_limit, vmem_budget = _vmem_budgets()
    tile_rows = _choose_tile_rows(rows, hidden, itemsize, vmem_budget)
    grid = (_ceil_div(rows, tile_rows),)   # partial last block; no host padding

    # TODO(synk): for hiddens so large that even an 8-row block exceeds the
    # VMEM budget, split the hidden axis (two-pass stat) instead of one block.

    kernel = functools.partial(_actquant_kernel, bits=bits, inv_hidden=1.0 / hidden)

    out2d = pl.pallas_call(
        kernel,
        out_shape=jax.ShapeDtypeStruct((rows, hidden), x.dtype),
        grid_spec=pltpu.PrefetchScalarGridSpec(
            num_scalar_prefetch=0,
            grid=grid,
            # Last block dim equals the full array dim -> legal for ragged hidden;
            # lane-dense stores whenever hidden % 128 == 0.
            in_specs=[pl.BlockSpec((tile_rows, hidden), lambda i: (i, 0))],
            out_specs=pl.BlockSpec((tile_rows, hidden), lambda i: (i, 0)),
        ),
        compiler_params=pltpu.CompilerParams(
            dimension_semantics=("parallel",),
            vmem_limit_bytes=vmem_limit,
        ),
        cost_estimate=pl.CostEstimate(
            flops=10 * rows * hidden,
            transcendentals=0,
            bytes_accessed=2 * rows * hidden * itemsize,
        ),
    )(x2d)

    return out2d.reshape(orig_shape)


def _reference(x, bits):
    x = x.astype(jnp.float32)
    eps = 1e-8
    if bits == 8:
        gamma = jnp.max(jnp.abs(x), axis=-1, keepdims=True)
        q = jnp.clip(jnp.round(127.0 * x / (gamma + eps)), -128.0, 127.0)
        return gamma * q / 127.0
    else:
        beta = jnp.mean(jnp.abs(x), axis=-1, keepdims=True)
        s7 = math.sqrt(7.0)
        q = jnp.clip(jnp.round(s7 * x / (beta + eps)), -8.0, 7.0)
        return beta * q / s7


if __name__ == "__main__":
    key = jax.random.PRNGKey(0)
    k1, k2 = jax.random.split(key)
    # (batch, seq, hidden) plus a ragged shape exercising the partial row block
    # and the ragged-hidden (masked-store) path.
    inputs = [
        jax.random.normal(k1, (2, 8, 32), dtype=jnp.float32),
        jax.random.normal(k2, (3, 5, 200), dtype=jnp.float32),
    ]

    ok = True
    for x in inputs:
        for bits in (8, 4):
            out = jax.block_until_ready(activation_quantize(x, bits=bits))
            ref = _reference(x, bits)
            if out.shape != x.shape or not jnp.allclose(out, ref, atol=1e-5, rtol=1e-5):
                ok = False
                print(f"MISMATCH shape={x.shape} bits={bits} "
                      f"max_err={float(jnp.max(jnp.abs(out - ref)))}")

    if ok:
        print("KERNEL_OK")
</pallas_src>

<mosaic_0001>
module attributes {stable_mosaic.version = 11 : i64} {
  func.func @_actquant_kernel(%arg0: i32, %arg1: memref<16x32xf32, #tpu.memory_space<vmem>>, %arg2: memref<16x32xf32, #tpu.memory_space<vmem>>) attributes {dimension_semantics = [#tpu.dimension_semantics<parallel>], iteration_bounds = array<i64: 1>, scalar_prefetch = 0 : i64, scratch_operands = 0 : i64, tpu.core_type = #tpu.core_type<tc>, window_params = [{transform_indices = @transform_0, window_bounds = array<i64: 16, 32>}, {transform_indices = @transform_1, window_bounds = array<i64: 16, 32>}]} {
    %c0 = arith.constant 0 : index
    %c0_0 = arith.constant 0 : index
    %0 = vector.load %arg1[%c0, %c0_0] : memref<16x32xf32, #tpu.memory_space<vmem>>, vector<16x32xf32>
    %1 = math.absf %0 : vector<16x32xf32>
    %cst = arith.constant dense<0xFF800000> : vector<16xf32>
    %2 = vector.multi_reduction <maximumf>, %1, %cst [1] : vector<16x32xf32> to vector<16xf32>
    %3 = vector.shape_cast %2 : vector<16xf32> to vector<16x1xf32>
    %cst_1 = arith.constant 9.99999993E-9 : f32
    %4 = vector.broadcast %cst_1 : f32 to vector<16x1xf32>
    %5 = arith.addf %3, %4 : vector<16x1xf32>
    %6 = tpu.reciprocal %5 : vector<16x1xf32> -> vector<16x1xf32>
    %cst_2 = arith.constant 1.270000e+02 : f32
    %7 = vector.broadcast %cst_2 : f32 to vector<16x1xf32>
    %8 = arith.mulf %7, %6 : vector<16x1xf32>
    %9 = vector.broadcast %8 : vector<16x1xf32> to vector<16x32xf32>
    %10 = arith.mulf %0, %9 : vector<16x32xf32>
    %11 = math.roundeven %10 : vector<16x32xf32>
    %cst_3 = arith.constant -1.280000e+02 : f32
    %cst_4 = arith.constant 1.270000e+02 : f32
    %12 = vector.broadcast %cst_3 : f32 to vector<16x32xf32>
    %13 = arith.maximumf %12, %11 : vector<16x32xf32>
    %14 = vector.broadcast %cst_4 : f32 to vector<16x32xf32>
    %15 = arith.minimumf %14, %13 : vector<16x32xf32>
    %cst_5 = arith.constant 0.00787401571 : f32
    %16 = vector.broadcast %cst_5 : f32 to vector<16x1xf32>
    %17 = arith.mulf %3, %16 : vector<16x1xf32>
    %18 = vector.broadcast %17 : vector<16x1xf32> to vector<16x32xf32>
    %19 = arith.mulf %15, %18 : vector<16x32xf32>
    %c0_6 = arith.constant 0 : index
    %c0_7 = arith.constant 0 : index
    %20 = vector.load %arg2[%c0_6, %c0_7] : memref<16x32xf32, #tpu.memory_space<vmem>>, vector<16x32xf32>
    tpu.vector_store %arg2[%c0_6, %c0_7], %19 {strides = array<i32>} : memref<16x32xf32, #tpu.memory_space<vmem>>, vector<16x32xf32>,
    return
  }
  func.func @transform_0(%arg0: i32) -> (i32, i32) {
    %c0_i32 = arith.constant 0 : i32
    %c0_i32_0 = arith.constant 0 : i32
    return %arg0, %c0_i32 : i32, i32
  }
  func.func @transform_1(%arg0: i32) -> (i32, i32) {
    %c0_i32 = arith.constant 0 : i32
    %c0_i32_0 = arith.constant 0 : i32
    return %arg0, %c0_i32 : i32, i32
  }
}

</mosaic_0001>

<llo_original>
// kernel: tpu_custom_call.1
$region0: #{tpu_custom_call.1}
  #allocation0 [shape = 'u32[]', space=smem, size = 0x4, offset = 0x4, fixed_abs, tag = 'smem constant byte address 0x4 - core index']
  #allocation1 [shape = 'u32[144,128]{1,0:T(1,128)}', space=vmem, size = 0x12000, scoped, tag = 'internal scratch']
  %s0 = inlined_call_operand.hbm [shape: f32[16,32], index: 0, kind: input, shape index: {}]
  %s1 = inlined_call_operand.hbm [shape: f32[16,32], index: 1, kind: output, shape index: {}]
  %s2 = sld [smem:[#allocation0]]
  $region18: #{tpu_custom_call.1} parent=0
    _
  %s4 = ssub.s32 1, %s2
  %s5 = scalar_select 0, %s4, %s2
  $region1: #{tpu_custom_call.1} parent=0
    #allocation2 [shape = 'u8[8192]{0}', space=vmem, size = 0x2000, scoped, tag = 'input window, operand 0, single buffered']
    #allocation3 [shape = 's32[1]{0}', space=sflag, size = 0x4, scoped, tag = 'scoped memory for tpu_custom_call.1']
    #allocation4 [shape = 's32[1]{0}', space=sflag, size = 0x4, scoped, tag = 'scoped memory for tpu_custom_call.1']
    #allocation5 [shape = 'u8[8192]{0}', space=vmem, size = 0x2000, scoped, tag = 'output window, operand 0, single buffered']
    %6 = vsyncpa [#allocation3], 0
    %7 = vsyncpa [#allocation4], 0
    // Predicated region
    $region2: #{tpu_custom_call.1} parent=1 // pred_check
      _
    $region3: #{tpu_custom_call.1} parent=1 // pred_check_branch
      %9 = sbr.rel (0) target = $region5
    $region4: #{tpu_custom_call.1} parent=1 // pred_region
      %s11 = ssub.s32 256, 256
      %12 = vsyncadd [#allocation3], %s11
      %s13 = sshll.u32 [#allocation2], 4
      %s14 = int_to_ptr.vmem [resolvable:$true] %s13
      %19 = dma.hbm_to_vmem [thread:$0]  %s0, 256, %s14, [#allocation3], 128, 128, 8
    $region5: #{tpu_custom_call.1} parent=1 // pred_fallthru
      _
    // Predicated region
    $region6: #{tpu_custom_call.1} parent=1 // pred_check
      _
    $region7: #{tpu_custom_call.1} parent=1 // pred_check_branch
      %21 = sbr.rel (0) target = $region9
    $region8: #{tpu_custom_call.1} parent=1 // pred_region
      %22 = dma.done [#allocation3], 256
    $region9: #{tpu_custom_call.1} parent=1 // pred_fallthru
      _
    %v23 = vld [vmem:[#allocation2] sm:$0xff]
    %v24 = vld [vmem:[#allocation2 + $0x8] sm:$0xff]
    %v25 = vand.u32 2147483647, %v23
    %v26 = vand.u32 2147483647, %v24
    %vm27 = vcmask 261120
    %v28 = vsel %vm27, %v25, -inf
    %29 = vmax.xlane.f32.xlu0 %v28
    %v30 = vpop.xlane.xlu0 %29
    %v31 = vsel %vm27, %v26, -inf
    %32 = vmax.xlane.f32.xlu0 %v31
    %v33 = vpop.xlane.xlu0 %32
    %v34 = vadd.f32 %v30, 1e-08
    %v35 = vadd.f32 %v33, 1e-08
    %v36 = vrcp.pop %v34
    %v37 = vrcp.pop %v35
    %v38 = vmul.f32 %v36, 127.0
    %v39 = vmul.f32 %v37, 127.0
    %v40 = vmul.f32 %v23, %v38
    %v41 = vmul.f32 %v24, %v39
    %v42 = vround.ne.pseudo %v40
    %v43 = vround.ne.pseudo %v41
    %v44 = vmax.f32 %v42, -128.0
    %v45 = vmax.f32 %v43, -128.0
    %v46 = vmin.f32 %v44, 127.0
    %v47 = vmin.f32 %v45, 127.0
    %v48 = vmul.f32 %v30, 0.007874016
    %v49 = vmul.f32 %v33, 0.007874016
    %v50 = vmul.f32 %v46, %v48
    %v51 = vmul.f32 %v47, %v49
    %52 = vst.msk [vmem:[#allocation5] sm:$0xff] %vm27, %v50
    %53 = vst.msk [vmem:[#allocation5 + $0x8] sm:$0xff] %vm27, %v51
    // Predicated region
    $region10: #{tpu_custom_call.1} parent=1 // pred_check
      _
    $region11: #{tpu_custom_call.1} parent=1 // pred_check_branch
      %55 = sbr.rel (0) target = $region13
    $region12: #{tpu_custom_call.1} parent=1 // pred_region
      %s57 = ssub.s32 256, 256
      %58 = vsyncadd [#allocation4], %s57
      %s59 = sshll.u32 [#allocation5], 4
      %s60 = int_to_ptr.vmem [resolvable:$true] %s59
      %65 = dma.vmem_to_hbm [thread:$0]  %s60, 256, %s1, [#allocation4], 128, 128, 8
    $region13: #{tpu_custom_call.1} parent=1 // pred_fallthru
      _
    // Predicated region
    $region14: #{tpu_custom_call.1} parent=1 // pred_check
      _
    $region15: #{tpu_custom_call.1} parent=1 // pred_check_branch
      %67 = sbr.rel (0) target = $region17
    $region16: #{tpu_custom_call.1} parent=1 // pred_region
      %68 = dma.done [#allocation4], 256
    $region17: #{tpu_custom_call.1} parent=1 // pred_fallthru
      _
    %69 = vsyncpa [#allocation3], 1
    %70 = vsyncpa [#allocation4], 1

</llo_original>
